<compile_context>
chip_gen: v6e
topology: v6e:2x2x1
jax: 0.10.0
libtpu: 0.0.40
codegen_flags: <defaults>
</compile_context>

<pallas_src>
from collections import OrderedDict

import numpy as np
import jax
import jax.numpy as jnp
from jax import lax
from jax.experimental import pallas as pl
from jax.experimental.pallas import tpu as pltpu


def _round_up(x, m):
    return ((x + m - 1) // m) * m


# ----------------------------- fused Pallas kernel ---------------------------

def _fused_kernel(p_ref, w1_ref, b1_ref, w2_ref, b2_ref, o_ref):
    # p_ref  : (1, M, KP)    super-patch LHS for one batch block (MXU dtype)
    # w1_ref : (KP, K2P)     conv1 weight remapped so P @ w1 is conv2's im2col
    # b1_ref : (1, K2P)      conv1 bias tiled per conv2 tap (f32)
    # w2_ref : (K2P, C2P)    conv2 weight, (tap, in-chan) x out-chan (MXU dtype)
    # b2_ref : (1, C2P)      conv2 bias (f32)
    # o_ref  : (1, M, C2P)   fused output, lane-dense (f32)

    # conv1 (+ im2col layout) + bias + ReLU: one MXU matmul, f32 accumulate.
    im2 = jnp.dot(p_ref[0], w1_ref[...], preferred_element_type=jnp.float32)
    im2 = jnp.maximum(im2 + b1_ref[...], 0.0)          # elementwise stays f32

    # conv2 + bias + ReLU: single K=512 MXU matmul, f32 accumulate.
    out = jnp.dot(im2.astype(w2_ref.dtype), w2_ref[...],
                  preferred_element_type=jnp.float32)
    o_ref[0] = jnp.maximum(out + b2_ref[...], 0.0).astype(o_ref.dtype)


def _build_fused_conv_relu_x2(conv1, conv2, *, mxu_dtype=jnp.bfloat16,
                              batch_block=8):
    """Builds a jitted fused forward for Conv2d -> ReLU -> Conv2d -> ReLU."""
    w1 = np.asarray(conv1.weight, np.float32)     # (OC1, 1, KH1, KW1)
    b1 = np.asarray(conv1.bias, np.float32)       # (OC1,)
    w2 = np.asarray(conv2.weight, np.float32)     # (OC2, OC1, KH2, KW2)
    b2 = np.asarray(conv2.bias, np.float32)       # (OC2,)
    oc1, cin, kh1, kw1 = w1.shape
    oc2, oc1_, kh2, kw2 = w2.shape
    assert cin == 1, "fused path assumes Conv2d(1, ...) as in the docstring example"
    assert oc1_ == oc1

    wh, ww = kh1 + kh2 - 1, kw1 + kw2 - 1         # super-patch window (9 x 9)
    k1 = wh * ww                                  # 81
    k2 = kh2 * kw2 * oc1                          # 25 * 20 = 500
    kp = _round_up(k1, 128)                       # 128  (LHS lane / RHS sublane)
    k2p = _round_up(k2, 128)                      # 512  (packed conv2 contraction)
    c2p = _round_up(oc2, 128)                     # 128  (lane-dense output)

    # ---- one-time parameter repack (never per forward call) -----------------
    # W1big[di*ww+dj, t*oc1+c] = w1[c, 0, di-i, dj-j] for t=(i,j), valid offsets.
    # Then (P @ W1big)[m, t*oc1+c] == conv1 pre-activation at spatial position
    # (y+i, x+j), channel c, i.e. exactly conv2's im2col entry.
    w1big = np.zeros((kp, k2p), np.float32)
    for i in range(kh2):
        for j in range(kw2):
            t = i * kw2 + j
            for a in range(kh1):
                for b in range(kw1):
                    w1big[(i + a) * ww + (j + b),
                          t * oc1:(t + 1) * oc1] = w1[:, 0, a, b]
    b1big = np.zeros((1, k2p), np.float32)
    b1big[0, :k2] = np.tile(b1, kh2 * kw2)
    # W2packed[t*oc1+c, o] = w2[o, c, i, j]  (tap-major, channel-minor K axis)
    w2packed = np.zeros((k2p, c2p), np.float32)
    w2packed[:k2, :oc2] = np.transpose(w2, (2, 3, 1, 0)).reshape(k2, oc2)
    b2p = np.zeros((1, c2p), np.float32)
    b2p[0, :oc2] = b2

    w1m = jnp.asarray(w1big, dtype=mxu_dtype)     # MXU operands in bf16
    w2m = jnp.asarray(w2packed, dtype=mxu_dtype)
    b1m = jnp.asarray(b1big)                      # biases stay f32
    b2m = jnp.asarray(b2p)

    @jax.jit
    def forward(x):                               # x: (N, 1, H, W), NCHW
        n, cin_, h, w = x.shape
        assert cin_ == cin
        oh2, ow2 = h - wh + 1, w - ww + 1         # final conv2 output size
        m2 = oh2 * ow2

        # Batch block: stack images along M to fill the MXU (M = b_blk * m2).
        b_blk = max(1, min(batch_block, n))
        n_pad = _round_up(n, b_blk)
        n_blocks = n_pad // b_blk
        m = b_blk * m2

        # Super-patch im2col: one (wh*ww)-wide row per conv2 output position,
        # built under jit in the wrapper (tiny at 16x16: ~20 KiB/image).
        # TODO(synk): build the super-patch in-kernel from the raw image for
        # large H/W, where this wrapper-side duplication would dominate HBM BW.
        xs = x[:, 0]                              # (N, H, W)
        cols = [xs[:, di:di + oh2, dj:dj + ow2]
                for di in range(wh) for dj in range(ww)]
        p = jnp.stack(cols, axis=-1).reshape(n, m2, k1)
        p = jnp.pad(p, ((0, n_pad - n), (0, 0), (0, kp - k1)))
        p = p.reshape(n_blocks, m, kp).astype(mxu_dtype)

        out = pl.pallas_call(
            _fused_kernel,
            out_shape=jax.ShapeDtypeStruct((n_blocks, m, c2p), jnp.float32),
            grid=(n_blocks,),                     # one batch block per grid step
            in_specs=[
                pl.BlockSpec((1, m, kp), lambda g: (g, 0, 0)),
                # Constant index maps: weights/biases are fetched once and stay
                # VMEM-resident across the batch loop.
                pl.BlockSpec((kp, k2p), lambda g: (0, 0)),
                pl.BlockSpec((1, k2p), lambda g: (0, 0)),
                pl.BlockSpec((k2p, c2p), lambda g: (0, 0)),
                pl.BlockSpec((1, c2p), lambda g: (0, 0)),
            ],
            out_specs=pl.BlockSpec((1, m, c2p), lambda g: (g, 0, 0)),
            compiler_params=pltpu.CompilerParams(
                dimension_semantics=("parallel",),       # v7x: 2 TCs split blocks
                vmem_limit_bytes=32 * 1024 * 1024),      # footprint ~2.3 MiB
        )(p, w1m, b1m, w2m, b2m)

        # Back to NCHW at the model boundary, dropping batch/channel padding.
        out = out.reshape(n_pad, m2, c2p)[:n, :, :oc2]
        return out.reshape(n, oh2, ow2, oc2).transpose(0, 3, 1, 2).astype(x.dtype)

    return forward


# ------------------------------- module wrappers ------------------------------

class Conv2d:
    """Param holder matching torch.nn.Conv2d(C_in, C_out, K): valid conv, stride 1."""

    def __init__(self, weight, bias):
        self.weight = jnp.asarray(weight)     # (OC, C, KH, KW), PyTorch layout
        self.bias = jnp.asarray(bias)         # (OC,)


class ReLU:
    pass


class Sequential:
    """Mirrors torch Sequential: ordered module container; forward applies in order."""

    def __init__(self, *args, **kwargs):
        self._modules = OrderedDict()
        if len(args) == 1 and isinstance(args[0], OrderedDict):
            for key, module in args[0].items():
                self._modules[key] = module
        else:
            for idx, module in enumerate(args):
                self._modules[str(idx)] = module
        for name, module in kwargs.items():
            if name in self._modules:
                raise ValueError('name exists.')
            self._modules[name] = module
        self._fused = None

    def __len__(self):
        return len(self._modules)

    def __getitem__(self, idx):
        if not -len(self) <= idx < len(self):
            raise IndexError('index {} is out of range'.format(idx))
        if idx < 0:
            idx += len(self)
        return list(self._modules.values())[idx]

    def add(self, module, name=None):
        if name is None:
            name = str(len(self._modules))
            if name in self._modules:
                raise KeyError('name exists')
        self._modules[name] = module

    def __call__(self, x):
        mods = list(self._modules.values())
        if (len(mods) == 4 and isinstance(mods[0], Conv2d) and isinstance(mods[1], ReLU)
                and isinstance(mods[2], Conv2d) and isinstance(mods[3], ReLU)):
            if self._fused is None:
                self._fused = _build_fused_conv_relu_x2(mods[0], mods[2])
            return self._fused(x)
        # TODO(synk): generic (non-fused) execution of arbitrary module pipelines
        # is not implemented; only the docstring example pipeline is supported.
        raise NotImplementedError(
            "Only the Conv2d->ReLU->Conv2d->ReLU example pipeline is implemented.")


# ------------------------------------ main -------------------------------------

def _ref_forward(x, w1, b1, w2, b2):
    dn = ('NCHW', 'OIHW', 'NCHW')
    y = lax.conv_general_dilated(x, w1, (1, 1), 'VALID', dimension_numbers=dn,
                                 precision=lax.Precision.HIGHEST)
    y = jnp.maximum(y + b1[None, :, None, None], 0.0)
    y = lax.conv_general_dilated(y, w2, (1, 1), 'VALID', dimension_numbers=dn,
                                 precision=lax.Precision.HIGHEST)
    return jnp.maximum(y + b2[None, :, None, None], 0.0)


if __name__ == "__main__":
    key = jax.random.PRNGKey(0)
    kx, kw1, kb1, kw2, kb2 = jax.random.split(key, 5)

    # Input: batch=2, channels=1 (per the Conv2d(1, 20, 5) example), spatial=16
    x = jax.random.normal(kx, (2, 1, 16, 16), dtype=jnp.float32)

    w1 = jax.random.normal(kw1, (20, 1, 5, 5), dtype=jnp.float32) * (1.0 / 25 ** 0.5)
    b1 = jax.random.normal(kb1, (20,), dtype=jnp.float32) * 0.01
    w2 = jax.random.normal(kw2, (64, 20, 5, 5), dtype=jnp.float32) * (1.0 / 500 ** 0.5)
    b2 = jax.random.normal(kb2, (64,), dtype=jnp.float32) * 0.01

    model = Sequential(
        Conv2d(w1, b1),
        ReLU(),
        Conv2d(w2, b2),
        ReLU(),
    )

    y = jax.block_until_ready(model(x))

    assert y.shape == (2, 64, 8, 8), y.shape
    assert y.dtype == jnp.float32
    assert bool(jnp.all(y >= 0.0))               # ReLU output is non-negative

    y_ref = jax.block_until_ready(_ref_forward(x, w1, b1, w2, b2))

    # Default path feeds the MXU bf16 operands -> bf16-level tolerance.
    max_err_bf16 = float(jnp.max(jnp.abs(y - y_ref)))
    assert jnp.allclose(y, y_ref, atol=5e-2, rtol=5e-2), max_err_bf16

    # Structural check: same kernel with f32 MXU operands, tighter tolerance.
    f32_forward = _build_fused_conv_relu_x2(model[0], model[2],
                                            mxu_dtype=jnp.float32)
    y32 = jax.block_until_ready(f32_forward(x))
    max_err_f32 = float(jnp.max(jnp.abs(y32 - y_ref)))
    assert jnp.allclose(y32, y_ref, atol=2e-2, rtol=2e-2), max_err_f32

    print("KERNEL_OK")
</pallas_src>

<mosaic_0001>
module attributes {stable_mosaic.version = 11 : i64} {
  func.func @_fused_kernel(%arg0: i32, %arg1: memref<1x128x128xbf16, #tpu.memory_space<vmem>>, %arg2: memref<128x512xbf16, #tpu.memory_space<vmem>>, %arg3: memref<1x512xf32, #tpu.memory_space<vmem>>, %arg4: memref<512x128xbf16, #tpu.memory_space<vmem>>, %arg5: memref<1x128xf32, #tpu.memory_space<vmem>>, %arg6: memref<1x128x128xf32, #tpu.memory_space<vmem>>) attributes {dimension_semantics = [#tpu.dimension_semantics<parallel>], iteration_bounds = array<i64: 1>, scalar_prefetch = 0 : i64, scratch_operands = 0 : i64, tpu.core_type = #tpu.core_type<tc>, window_params = [{transform_indices = @transform_0, window_bounds = array<i64: 1, 128, 128>}, {pipeline_mode = #tpu.pipeline_mode<synchronous>, transform_indices = @transform_1, window_bounds = array<i64: 128, 512>}, {pipeline_mode = #tpu.pipeline_mode<synchronous>, transform_indices = @transform_2, window_bounds = array<i64: 1, 512>}, {pipeline_mode = #tpu.pipeline_mode<synchronous>, transform_indices = @transform_3, window_bounds = array<i64: 512, 128>}, {pipeline_mode = #tpu.pipeline_mode<synchronous>, transform_indices = @transform_4, window_bounds = array<i64: 1, 128>}, {transform_indices = @transform_5, window_bounds = array<i64: 1, 128, 128>}]} {
    %c0 = arith.constant 0 : index
    %c0_0 = arith.constant 0 : index
    %c0_1 = arith.constant 0 : index
    %0 = vector.load %arg1[%c0, %c0_0, %c0_1] : memref<1x128x128xbf16, #tpu.memory_space<vmem>>, vector<1x128x128xbf16>
    %1 = vector.shape_cast %0 : vector<1x128x128xbf16> to vector<128x128xbf16>
    %c0_2 = arith.constant 0 : index
    %c0_3 = arith.constant 0 : index
    %2 = vector.load %arg2[%c0_2, %c0_3] : memref<128x512xbf16, #tpu.memory_space<vmem>>, vector<128x512xbf16>
    %cst = arith.constant dense<0.000000e+00> : vector<128x512xf32>
    %3 = tpu.matmul %1, %2, %cst {dimension_numbers = #tpu.dot_dimension_numbers<[1], [0], [0], [1], [0, 0, 1, 1], [], []>} : vector<128x128xbf16>, vector<128x512xbf16>, vector<128x512xf32> -> vector<128x512xf32>
    %c0_4 = arith.constant 0 : index
    %c0_5 = arith.constant 0 : index
    %4 = vector.load %arg3[%c0_4, %c0_5] : memref<1x512xf32, #tpu.memory_space<vmem>>, vector<1x512xf32>
    %5 = vector.broadcast %4 : vector<1x512xf32> to vector<128x512xf32>
    %6 = arith.addf %3, %5 : vector<128x512xf32>
    %cst_6 = arith.constant 0.000000e+00 : f32
    %7 = vector.broadcast %cst_6 : f32 to vector<128x512xf32>
    %8 = arith.maximumf %6, %7 : vector<128x512xf32>
    %9 = arith.truncf %8 : vector<128x512xf32> to vector<128x512xbf16>
    %c0_7 = arith.constant 0 : index
    %c0_8 = arith.constant 0 : index
    %10 = vector.load %arg4[%c0_7, %c0_8] : memref<512x128xbf16, #tpu.memory_space<vmem>>, vector<512x128xbf16>
    %cst_9 = arith.constant dense<0.000000e+00> : vector<128x128xf32>
    %11 = tpu.matmul %9, %10, %cst_9 {dimension_numbers = #tpu.dot_dimension_numbers<[1], [0], [0], [1], [0, 0, 1, 1], [], []>} : vector<128x512xbf16>, vector<512x128xbf16>, vector<128x128xf32> -> vector<128x128xf32>
    %c0_10 = arith.constant 0 : index
    %c0_11 = arith.constant 0 : index
    %12 = vector.load %arg5[%c0_10, %c0_11] : memref<1x128xf32, #tpu.memory_space<vmem>>, vector<1x128xf32>
    %13 = vector.broadcast %12 : vector<1x128xf32> to vector<128x128xf32>
    %14 = arith.addf %11, %13 : vector<128x128xf32>
    %cst_12 = arith.constant 0.000000e+00 : f32
    %15 = vector.broadcast %cst_12 : f32 to vector<128x128xf32>
    %16 = arith.maximumf %14, %15 : vector<128x128xf32>
    %c0_13 = arith.constant 0 : index
    %c0_14 = arith.constant 0 : index
    %c0_15 = arith.constant 0 : index
    %17 = vector.load %arg6[%c0_13, %c0_14, %c0_15] : memref<1x128x128xf32, #tpu.memory_space<vmem>>, vector<1x128x128xf32>
    %18 = vector.shape_cast %17 : vector<1x128x128xf32> to vector<128x128xf32>
    %19 = vector.shape_cast %16 : vector<128x128xf32> to vector<1x128x128xf32>
    tpu.vector_store %arg6[%c0_13, %c0_14, %c0_15], %19 {strides = array<i32>} : memref<1x128x128xf32, #tpu.memory_space<vmem>>, vector<1x128x128xf32>,
    return
  }
  func.func @transform_0(%arg0: i32) -> (i32, i32, i32) {
    %c0_i32 = arith.constant 0 : i32
    %c0_i32_0 = arith.constant 0 : i32
    %c0_i32_1 = arith.constant 0 : i32
    return %arg0, %c0_i32, %c0_i32_0 : i32, i32, i32
  }
  func.func @transform_1(%arg0: i32) -> (i32, i32) {
    %c0_i32 = arith.constant 0 : i32
    %c0_i32_0 = arith.constant 0 : i32
    %c0_i32_1 = arith.constant 0 : i32
    return %c0_i32, %c0_i32_0 : i32, i32
  }
  func.func @transform_2(%arg0: i32) -> (i32, i32) {
    %c0_i32 = arith.constant 0 : i32
    %c0_i32_0 = arith.constant 0 : i32
    %c0_i32_1 = arith.constant 0 : i32
    return %c0_i32, %c0_i32_0 : i32, i32
  }
  func.func @transform_3(%arg0: i32) -> (i32, i32) {
    %c0_i32 = arith.constant 0 : i32
    %c0_i32_0 = arith.constant 0 : i32
    %c0_i32_1 = arith.constant 0 : i32
    return %c0_i32, %c0_i32_0 : i32, i32
  }
  func.func @transform_4(%arg0: i32) -> (i32, i32) {
    %c0_i32 = arith.constant 0 : i32
    %c0_i32_0 = arith.constant 0 : i32
    %c0_i32_1 = arith.constant 0 : i32
    return %c0_i32, %c0_i32_0 : i32, i32
  }
  func.func @transform_5(%arg0: i32) -> (i32, i32, i32) {
    %c0_i32 = arith.constant 0 : i32
    %c0_i32_0 = arith.constant 0 : i32
    %c0_i32_1 = arith.constant 0 : i32
    return %arg0, %c0_i32, %c0_i32_0 : i32, i32, i32
  }
}

</mosaic_0001>

<llo_original>
// kernel: forward.1
$region0: #{forward.1}
  #allocation0 [shape = 'u32[]', space=smem, size = 0x4, offset = 0x4, fixed_abs, tag = 'smem constant byte address 0x4 - core index']
  #allocation1 [shape = 'u32[144,128]{1,0:T(1,128)}', space=vmem, size = 0x12000, scoped, tag = 'internal scratch']
  %s0 = inlined_call_operand.vmem [shape: bf16[1,128,128], index: 0, kind: input, shape index: {}]
  %s1 = inlined_call_operand.vmem [shape: bf16[128,512], index: 1, kind: input, shape index: {}]
  %s2 = inlined_call_operand.vmem [shape: f32[1,512], index: 2, kind: input, shape index: {}]
  %s3 = inlined_call_operand.vmem [shape: bf16[512,128], index: 3, kind: input, shape index: {}]
  %s4 = inlined_call_operand.vmem [shape: f32[1,128], index: 4, kind: input, shape index: {}]
  %s5 = inlined_call_operand.vmem [shape: f32[1,128,128], index: 5, kind: output, shape index: {}]
  %s6 = sld [smem:[#allocation0]]
  $region30: #{forward.1} parent=0
    _
  %s8 = ssub.s32 1, %s6
  %s9 = scalar_select 0, %s8, %s6
  // Predicated region
  $region2: #{forward.1} parent=0 // pred_check
    _
  $region3: #{forward.1} parent=0 // pred_check_branch
    %11 = sbr.rel (0) target = $region5
  $region4: #{forward.1} parent=0 // pred_region
    _
  $region5: #{forward.1} parent=0 // pred_fallthru
    _
  // Predicated region
  $region6: #{forward.1} parent=0 // pred_check
    _
  $region7: #{forward.1} parent=0 // pred_check_branch
    %13 = sbr.rel (0) target = $region9
  $region8: #{forward.1} parent=0 // pred_region
    _
  $region9: #{forward.1} parent=0 // pred_fallthru
    _
  // Predicated region
  $region10: #{forward.1} parent=0 // pred_check
    _
  $region11: #{forward.1} parent=0 // pred_check_branch
    %15 = sbr.rel (0) target = $region13
  $region12: #{forward.1} parent=0 // pred_region
    _
  $region13: #{forward.1} parent=0 // pred_fallthru
    _
  // Predicated region
  $region14: #{forward.1} parent=0 // pred_check
    _
  $region15: #{forward.1} parent=0 // pred_check_branch
    %17 = sbr.rel (0) target = $region17
  $region16: #{forward.1} parent=0 // pred_region
    _
  $region17: #{forward.1} parent=0 // pred_fallthru
    _
  // Predicated region
  $region18: #{forward.1} parent=0 // pred_check
    _
  $region19: #{forward.1} parent=0 // pred_check_branch
    %19 = sbr.rel (0) target = $region21
  $region20: #{forward.1} parent=0 // pred_region
    _
  $region21: #{forward.1} parent=0 // pred_fallthru
    _
  %v21 = vld [vmem:[%s0] sm:$0xf]
  %v22 = vld [vmem:[%s0 + $0x4] sm:$0xf]
  %v23 = vld [vmem:[%s0 + $0x8] sm:$0xf]
  %v24 = vld [vmem:[%s0 + $0xc] sm:$0xf]
  %v25 = vld [vmem:[%s0 + $0x10] sm:$0xf]
  %v26 = vld [vmem:[%s0 + $0x14] sm:$0xf]
  %v27 = vld [vmem:[%s0 + $0x18] sm:$0xf]
  %v28 = vld [vmem:[%s0 + $0x1c] sm:$0xf]
  %v29 = vld [vmem:[%s0 + $0x20] sm:$0xf]
  %v30 = vld [vmem:[%s0 + $0x24] sm:$0xf]
  %v31 = vld [vmem:[%s0 + $0x28] sm:$0xf]
  %v32 = vld [vmem:[%s0 + $0x2c] sm:$0xf]
  %v33 = vld [vmem:[%s0 + $0x30] sm:$0xf]
  %v34 = vld [vmem:[%s0 + $0x34] sm:$0xf]
  %v35 = vld [vmem:[%s0 + $0x38] sm:$0xf]
  %v36 = vld [vmem:[%s0 + $0x3c] sm:$0xf]
  %v37 = vld [vmem:[%s1] sm:$0xff]
  %v38 = vld [vmem:[%s1 + $0x8] sm:$0xff]
  %v39 = vld [vmem:[%s1 + $0x10] sm:$0xff]
  %v40 = vld [vmem:[%s1 + $0x18] sm:$0xff]
  %v41 = vld [vmem:[%s1 + $0x20] sm:$0xff]
  %v42 = vld [vmem:[%s1 + $0x28] sm:$0xff]
  %v43 = vld [vmem:[%s1 + $0x30] sm:$0xff]
  %v44 = vld [vmem:[%s1 + $0x38] sm:$0xff]
  %v45 = vld [vmem:[%s1 + $0x40] sm:$0xff]
  %v46 = vld [vmem:[%s1 + $0x48] sm:$0xff]
  %v47 = vld [vmem:[%s1 + $0x50] sm:$0xff]
  %v48 = vld [vmem:[%s1 + $0x58] sm:$0xff]
  %v49 = vld [vmem:[%s1 + $0x60] sm:$0xff]
  %v50 = vld [vmem:[%s1 + $0x68] sm:$0xff]
  %v51 = vld [vmem:[%s1 + $0x70] sm:$0xff]
  %v52 = vld [vmem:[%s1 + $0x78] sm:$0xff]
  %v53 = vld [vmem:[%s1 + $0x80] sm:$0xff]
  %v54 = vld [vmem:[%s1 + $0x88] sm:$0xff]
  %v55 = vld [vmem:[%s1 + $0x90] sm:$0xff]
  %v56 = vld [vmem:[%s1 + $0x98] sm:$0xff]
  %v57 = vld [vmem:[%s1 + $0xa0] sm:$0xff]
  %v58 = vld [vmem:[%s1 + $0xa8] sm:$0xff]
  %v59 = vld [vmem:[%s1 + $0xb0] sm:$0xff]
  %v60 = vld [vmem:[%s1 + $0xb8] sm:$0xff]
  %v61 = vld [vmem:[%s1 + $0xc0] sm:$0xff]
  %v62 = vld [vmem:[%s1 + $0xc8] sm:$0xff]
  %v63 = vld [vmem:[%s1 + $0xd0] sm:$0xff]
  %v64 = vld [vmem:[%s1 + $0xd8] sm:$0xff]
  %v65 = vld [vmem:[%s1 + $0xe0] sm:$0xff]
  %v66 = vld [vmem:[%s1 + $0xe8] sm:$0xff]
  %v67 = vld [vmem:[%s1 + $0xf0] sm:$0xff]
  %v68 = vld [vmem:[%s1 + $0xf8] sm:$0xff]
  %v69 = vld [vmem:[%s2] sm:$0xf]
  %v71 = vlaneseq
  %v72 = vshrl.u32 %v71, 7
  %v73 = vsub.s32 0, %v72
  %v74 = vrot.slane %v69, %v73
  %v75 = vlaneseq
  %v76 = vshrl.u32 %v75, 7
  %v77 = vsub.s32 1, %v76
  %v78 = vrot.slane %v69, %v77
  %v79 = vlaneseq
  %v80 = vshrl.u32 %v79, 7
  %v81 = vsub.s32 2, %v80
  %v82 = vrot.slane %v69, %v81
  %v83 = vlaneseq
  %v84 = vshrl.u32 %v83, 7
  %v85 = vsub.s32 3, %v84
  %v86 = vrot.slane %v69, %v85
  %v107 = vunpack.c.l.b16 %v21
  %v108 = vunpack.c.l.b16 %v22
  %v109 = vunpack.c.l.b16 %v23
  %v110 = vunpack.c.l.b16 %v24
  %v111 = vunpack.c.l.b16 %v25
  %v112 = vunpack.c.l.b16 %v26
  %v113 = vunpack.c.l.b16 %v27
  %v114 = vunpack.c.l.b16 %v28
  %v115 = vunpack.c.l.b16 %v29
  %v116 = vunpack.c.l.b16 %v30
  %v117 = vunpack.c.l.b16 %v31
  %v118 = vunpack.c.l.b16 %v32
  %v119 = vunpack.c.l.b16 %v33
  %v120 = vunpack.c.l.b16 %v34
  %v121 = vunpack.c.l.b16 %v35
  %v122 = vunpack.c.l.b16 %v36
  %v123 = vpack.c.b16 %v108, %v107
  %v124 = vpack.c.b16 %v110, %v109
  %v125 = vpack.c.b16 %v112, %v111
  %v126 = vpack.c.b16 %v114, %v113
  %v127 = vpack.c.b16 %v116, %v115
  %v128 = vpack.c.b16 %v118, %v117
  %v129 = vpack.c.b16 %v120, %v119
  %v130 = vpack.c.b16 %v122, %v121
  %v171 = vunpack.c.l.b16 %v37
  %v172 = vunpack.c.h.b16 %v37
  %v173 = vunpack.c.l.b16 %v38
  %v174 = vunpack.c.h.b16 %v38
  %v175 = vunpack.c.l.b16 %v39
  %v176 = vunpack.c.h.b16 %v39
  %v177 = vunpack.c.l.b16 %v40
  %v178 = vunpack.c.h.b16 %v40
  %v179 = vunpack.c.l.b16 %v41
  %v180 = vunpack.c.h.b16 %v41
  %v181 = vunpack.c.l.b16 %v42
  %v182 = vunpack.c.h.b16 %v42
  %v183 = vunpack.c.l.b16 %v43
  %v184 = vunpack.c.h.b16 %v43
  %v185 = vunpack.c.l.b16 %v44
  %v186 = vunpack.c.h.b16 %v44
  %v187 = vunpack.c.l.b16 %v45
  %v188 = vunpack.c.h.b16 %v45
  %v189 = vunpack.c.l.b16 %v46
  %v190 = vunpack.c.h.b16 %v46
  %v191 = vunpack.c.l.b16 %v47
  %v192 = vunpack.c.h.b16 %v47
  %v193 = vunpack.c.l.b16 %v48
  %v194 = vunpack.c.h.b16 %v48
  %v195 = vunpack.c.l.b16 %v49
  %v196 = vunpack.c.h.b16 %v49
  %v197 = vunpack.c.l.b16 %v50
  %v198 = vunpack.c.h.b16 %v50
  %v199 = vunpack.c.l.b16 %v51
  %v200 = vunpack.c.h.b16 %v51
  %v201 = vunpack.c.l.b16 %v52
  %v202 = vunpack.c.h.b16 %v52
  %v203 = vunpack.c.l.b16 %v53
  %v204 = vunpack.c.h.b16 %v53
  %v205 = vunpack.c.l.b16 %v54
  %v206 = vunpack.c.h.b16 %v54
  %v207 = vunpack.c.l.b16 %v55
  %v208 = vunpack.c.h.b16 %v55
  %v209 = vunpack.c.l.b16 %v56
  %v210 = vunpack.c.h.b16 %v56
  %v211 = vunpack.c.l.b16 %v57
  %v212 = vunpack.c.h.b16 %v57
  %v213 = vunpack.c.l.b16 %v58
  %v214 = vunpack.c.h.b16 %v58
  %v215 = vunpack.c.l.b16 %v59
  %v216 = vunpack.c.h.b16 %v59
  %v217 = vunpack.c.l.b16 %v60
  %v218 = vunpack.c.h.b16 %v60
  %v219 = vunpack.c.l.b16 %v61
  %v220 = vunpack.c.h.b16 %v61
  %v221 = vunpack.c.l.b16 %v62
  %v222 = vunpack.c.h.b16 %v62
  %v223 = vunpack.c.l.b16 %v63
  %v224 = vunpack.c.h.b16 %v63
  %v225 = vunpack.c.l.b16 %v64
  %v226 = vunpack.c.h.b16 %v64
  %v227 = vunpack.c.l.b16 %v65
  %v228 = vunpack.c.h.b16 %v65
  %v229 = vunpack.c.l.b16 %v66
  %v230 = vunpack.c.h.b16 %v66
  %v231 = vunpack.c.l.b16 %v67
  %v232 = vunpack.c.h.b16 %v67
  %v233 = vunpack.c.l.b16 %v68
  %v234 = vunpack.c.h.b16 %v68
  %v235 = vpack.c.b16 %v175, %v171
  %v236 = vpack.c.b16 %v176, %v172
  %v237 = vpack.c.b16 %v177, %v173
  %v238 = vpack.c.b16 %v178, %v174
  %v239 = vpack.c.b16 %v183, %v179
  %v240 = vpack.c.b16 %v184, %v180
  %v241 = vpack.c.b16 %v185, %v181
  %v242 = vpack.c.b16 %v186, %v182
  %v243 = vpack.c.b16 %v191, %v187
  %v244 = vpack.c.b16 %v192, %v188
  %v245 = vpack.c.b16 %v193, %v189
  %v246 = vpack.c.b16 %v194, %v190
  %v247 = vpack.c.b16 %v199, %v195
  %v248 = vpack.c.b16 %v200, %v196
  %v249 = vpack.c.b16 %v201, %v197
  %v250 = vpack.c.b16 %v202, %v198
  %v251 = vpack.c.b16 %v207, %v203
  %v252 = vpack.c.b16 %v208, %v204
  %v253 = vpack.c.b16 %v209, %v205
  %v254 = vpack.c.b16 %v210, %v206
  %v255 = vpack.c.b16 %v215, %v211
  %v256 = vpack.c.b16 %v216, %v212
  %v257 = vpack.c.b16 %v217, %v213
  %v258 = vpack.c.b16 %v218, %v214
  %v259 = vpack.c.b16 %v223, %v219
  %v260 = vpack.c.b16 %v224, %v220
  %v261 = vpack.c.b16 %v225, %v221
  %v262 = vpack.c.b16 %v226, %v222
  %v263 = vpack.c.b16 %v231, %v227
  %v264 = vpack.c.b16 %v232, %v228
  %v265 = vpack.c.b16 %v233, %v229
  %v266 = vpack.c.b16 %v234, %v230
  %299 = vmatprep.subr.bf16.mxu0 %v264
  %300 = vmatpush1.bf16.msra.mxu0 %v263
  %301 = vmatprep.subr.bf16.mxu0 %v260
  %302 = vmatpush1.bf16.msra.mxu0 %v259
  %303 = vmatprep.subr.bf16.mxu0 %v256
  %304 = vmatpush1.bf16.msra.mxu0 %v255
  %305 = vmatprep.subr.bf16.mxu0 %v252
  %306 = vmatpush1.bf16.msra.mxu0 %v251
  %307 = vmatprep.subr.bf16.mxu0 %v248
  %308 = vmatpush1.bf16.msra.mxu0 %v247
  %309 = vmatprep.subr.bf16.mxu0 %v244
  %310 = vmatpush1.bf16.msra.mxu0 %v243
  %311 = vmatprep.subr.bf16.mxu0 %v240
  %312 = vmatpush1.bf16.msra.mxu0 %v239
  %313 = vmatprep.subr.bf16.mxu0 %v236
  %314 = vmatpush1.bf16.msra.mxu0 %v235
  %315 = vmatprep.subr.bf16.mxu0 0
  %316 = vmatpush2.bf16.msra.mxu0 0
  %317 = vmatprep.subr.bf16.mxu0 0
  %318 = vmatpush2.bf16.msra.mxu0 0
  %319 = vmatprep.subr.bf16.mxu0 0
  %320 = vmatpush2.bf16.msra.mxu0 0
  %321 = vmatprep.subr.bf16.mxu0 0
  %322 = vmatpush2.bf16.msra.mxu0 0
  %323 = vmatprep.subr.bf16.mxu0 0
  %324 = vmatpush2.bf16.msra.mxu0 0
  %325 = vmatprep.subr.bf16.mxu0 0
  %326 = vmatpush2.bf16.msra.mxu0 0
  %327 = vmatprep.subr.bf16.mxu0 0
  %328 = vmatpush2.bf16.msra.mxu0 0
  %329 = vmatprep.subr.bf16.mxu0 0
  %330 = vmatpush2.bf16.msra.mxu0 0
  %331 = vmatprep.mubr.bf16.mxu0 0
  %332 = vmatmul.mubr.bf16.gmra.mxu0 %v123
  %v333 = vpop.f32.mrf.mxu0
  %v334 = vadd.f32 %v74, %v333
  %v335 = vpop.f32.mrf.mxu0
  %v336 = vadd.f32 %v78, %v335
  %v337 = vpop.f32.mrf.mxu0
  %v338 = vadd.f32 %v74, %v337
  %v339 = vpop.f32.mrf.mxu0
  %v340 = vadd.f32 %v78, %v339
  %341 = vmatprep.mubr.bf16.mxu0 0
  %342 = vmatmul.mubr.bf16.gmra.mxu0 %v124
  %v343 = vpop.f32.mrf.mxu0
  %v344 = vadd.f32 %v74, %v343
  %v345 = vpop.f32.mrf.mxu0
  %v346 = vadd.f32 %v78, %v345
  %v347 = vpop.f32.mrf.mxu0
  %v348 = vadd.f32 %v74, %v347
  %v349 = vpop.f32.mrf.mxu0
  %v350 = vadd.f32 %v78, %v349
  %351 = vmatprep.mubr.bf16.mxu0 0
  %352 = vmatmul.mubr.bf16.gmra.mxu0 %v125
  %v353 = vpop.f32.mrf.mxu0
  %v354 = vadd.f32 %v74, %v353
  %v355 = vpop.f32.mrf.mxu0
  %v356 = vadd.f32 %v78, %v355
  %v357 = vpop.f32.mrf.mxu0
  %v358 = vadd.f32 %v74, %v357
  %v359 = vpop.f32.mrf.mxu0
  %v360 = vadd.f32 %v78, %v359
  %361 = vmatprep.mubr.bf16.mxu0 0
  %362 = vmatmul.mubr.bf16.gmra.mxu0 %v126
  %v363 = vpop.f32.mrf.mxu0
  %v364 = vadd.f32 %v74, %v363
  %v365 = vpop.f32.mrf.mxu0
  %v366 = vadd.f32 %v78, %v365
  %v367 = vpop.f32.mrf.mxu0
  %v368 = vadd.f32 %v74, %v367
  %v369 = vpop.f32.mrf.mxu0
  %v370 = vadd.f32 %v78, %v369
  %371 = vmatprep.mubr.bf16.mxu0 0
  %372 = vmatmul.mubr.bf16.gmra.mxu0 %v127
  %v373 = vpop.f32.mrf.mxu0
  %v374 = vadd.f32 %v74, %v373
  %v375 = vpop.f32.mrf.mxu0
  %v376 = vadd.f32 %v78, %v375
  %v377 = vpop.f32.mrf.mxu0
  %v378 = vadd.f32 %v74, %v377
  %v379 = vpop.f32.mrf.mxu0
  %v380 = vadd.f32 %v78, %v379
  %381 = vmatprep.mubr.bf16.mxu0 0
  %382 = vmatmul.mubr.bf16.gmra.mxu0 %v128
  %v383 = vpop.f32.mrf.mxu0
  %v384 = vadd.f32 %v74, %v383
  %v385 = vpop.f32.mrf.mxu0
  %v386 = vadd.f32 %v78, %v385
  %v387 = vpop.f32.mrf.mxu0
  %v388 = vadd.f32 %v74, %v387
  %v389 = vpop.f32.mrf.mxu0
  %v390 = vadd.f32 %v78, %v389
  %391 = vmatprep.mubr.bf16.mxu0 0
  %392 = vmatmul.mubr.bf16.gmra.mxu0 %v129
  %v393 = vpop.f32.mrf.mxu0
  %v394 = vadd.f32 %v74, %v393
  %v395 = vpop.f32.mrf.mxu0
  %v396 = vadd.f32 %v78, %v395
  %v397 = vpop.f32.mrf.mxu0
  %v398 = vadd.f32 %v74, %v397
  %v399 = vpop.f32.mrf.mxu0
  %v400 = vadd.f32 %v78, %v399
  %401 = vmatprep.mubr.bf16.mxu0 0
  %402 = vmatmul.mubr.bf16.gmra.mxu0 %v130
  %v403 = vpop.f32.mrf.mxu0
  %v404 = vadd.f32 %v74, %v403
  %v405 = vpop.f32.mrf.mxu0
  %v406 = vadd.f32 %v78, %v405
  %v407 = vpop.f32.mrf.mxu0
  %v408 = vadd.f32 %v74, %v407
  %v409 = vpop.f32.mrf.mxu0
  %v410 = vadd.f32 %v78, %v409
  %411 = vdwg.mxu0
  %412 = vmatprep.subr.bf16.mxu0 %v266
  %413 = vmatpush1.bf16.msra.mxu0 %v265
  %414 = vmatprep.subr.bf16.mxu0 %v262
  %415 = vmatpush1.bf16.msra.mxu0 %v261
  %416 = vmatprep.subr.bf16.mxu0 %v258
  %417 = vmatpush1.bf16.msra.mxu0 %v257
  %418 = vmatprep.subr.bf16.mxu0 %v254
  %419 = vmatpush1.bf16.msra.mxu0 %v253
  %420 = vmatprep.subr.bf16.mxu0 %v250
  %421 = vmatpush1.bf16.msra.mxu0 %v249
  %422 = vmatprep.subr.bf16.mxu0 %v246
  %423 = vmatpush1.bf16.msra.mxu0 %v245
  %424 = vmatprep.subr.bf16.mxu0 %v242
  %425 = vmatpush1.bf16.msra.mxu0 %v241
  %426 = vmatprep.subr.bf16.mxu0 %v238
  %427 = vmatpush1.bf16.msra.mxu0 %v237
  %428 = vmatprep.subr.bf16.mxu0 0
  %429 = vmatpush2.bf16.msra.mxu0 0
  %430 = vmatprep.subr.bf16.mxu0 0
  %431 = vmatpush2.bf16.msra.mxu0 0
  %432 = vmatprep.subr.bf16.mxu0 0
  %433 = vmatpush2.bf16.msra.mxu0 0
  %434 = vmatprep.subr.bf16.mxu0 0
  %435 = vmatpush2.bf16.msra.mxu0 0
  %436 = vmatprep.subr.bf16.mxu0 0
  %437 = vmatpush2.bf16.msra.mxu0 0
  %438 = vmatprep.subr.bf16.mxu0 0
  %439 = vmatpush2.bf16.msra.mxu0 0
  %440 = vmatprep.subr.bf16.mxu0 0
  %441 = vmatpush2.bf16.msra.mxu0 0
  %442 = vmatprep.subr.bf16.mxu0 0
  %443 = vmatpush2.bf16.msra.mxu0 0
  %444 = vmatprep.mubr.bf16.mxu0 0
  %445 = vmatmul.mubr.bf16.gmra.mxu0 %v123
  %v446 = vpop.f32.mrf.mxu0
  %v447 = vadd.f32 %v82, %v446
  %v448 = vpop.f32.mrf.mxu0
  %v449 = vadd.f32 %v86, %v448
  %v450 = vpop.f32.mrf.mxu0
  %v451 = vadd.f32 %v82, %v450
  %v452 = vpop.f32.mrf.mxu0
  %v453 = vadd.f32 %v86, %v452
  %454 = vmatprep.mubr.bf16.mxu0 0
  %455 = vmatmul.mubr.bf16.gmra.mxu0 %v124
  %v456 = vpop.f32.mrf.mxu0
  %v457 = vadd.f32 %v82, %v456
  %v458 = vpop.f32.mrf.mxu0
  %v459 = vadd.f32 %v86, %v458
  %v460 = vpop.f32.mrf.mxu0
  %v461 = vadd.f32 %v82, %v460
  %v462 = vpop.f32.mrf.mxu0
  %v463 = vadd.f32 %v86, %v462
  %464 = vmatprep.mubr.bf16.mxu0 0
  %465 = vmatmul.mubr.bf16.gmra.mxu0 %v125
  %v466 = vpop.f32.mrf.mxu0
  %v467 = vadd.f32 %v82, %v466
  %v468 = vpop.f32.mrf.mxu0
  %v469 = vadd.f32 %v86, %v468
  %v470 = vpop.f32.mrf.mxu0
  %v471 = vadd.f32 %v82, %v470
  %v472 = vpop.f32.mrf.mxu0
  %v473 = vadd.f32 %v86, %v472
  %474 = vmatprep.mubr.bf16.mxu0 0
  %475 = vmatmul.mubr.bf16.gmra.mxu0 %v126
  %v476 = vpop.f32.mrf.mxu0
  %v477 = vadd.f32 %v82, %v476
  %v478 = vpop.f32.mrf.mxu0
  %v479 = vadd.f32 %v86, %v478
  %v480 = vpop.f32.mrf.mxu0
  %v481 = vadd.f32 %v82, %v480
  %v482 = vpop.f32.mrf.mxu0
  %v483 = vadd.f32 %v86, %v482
  %484 = vmatprep.mubr.bf16.mxu0 0
  %485 = vmatmul.mubr.bf16.gmra.mxu0 %v127
  %v486 = vpop.f32.mrf.mxu0
  %v487 = vadd.f32 %v82, %v486
  %v488 = vpop.f32.mrf.mxu0
  %v489 = vadd.f32 %v86, %v488
  %v490 = vpop.f32.mrf.mxu0
  %v491 = vadd.f32 %v82, %v490
  %v492 = vpop.f32.mrf.mxu0
  %v493 = vadd.f32 %v86, %v492
  %494 = vmatprep.mubr.bf16.mxu0 0
  %495 = vmatmul.mubr.bf16.gmra.mxu0 %v128
  %v496 = vpop.f32.mrf.mxu0
  %v497 = vadd.f32 %v82, %v496
  %v498 = vpop.f32.mrf.mxu0
  %v499 = vadd.f32 %v86, %v498
  %v500 = vpop.f32.mrf.mxu0
  %v501 = vadd.f32 %v82, %v500
  %v502 = vpop.f32.mrf.mxu0
  %v503 = vadd.f32 %v86, %v502
  %504 = vmatprep.mubr.bf16.mxu0 0
  %505 = vmatmul.mubr.bf16.gmra.mxu0 %v129
  %v506 = vpop.f32.mrf.mxu0
  %v507 = vadd.f32 %v82, %v506
  %v508 = vpop.f32.mrf.mxu0
  %v509 = vadd.f32 %v86, %v508
  %v510 = vpop.f32.mrf.mxu0
  %v511 = vadd.f32 %v82, %v510
  %v512 = vpop.f32.mrf.mxu0
  %v513 = vadd.f32 %v86, %v512
  %514 = vmatprep.mubr.bf16.mxu0 0
  %515 = vmatmul.mubr.bf16.gmra.mxu0 %v130
  %v516 = vpop.f32.mrf.mxu0
  %v517 = vadd.f32 %v82, %v516
  %v518 = vpop.f32.mrf.mxu0
  %v519 = vadd.f32 %v86, %v518
  %v520 = vpop.f32.mrf.mxu0
  %v521 = vadd.f32 %v82, %v520
  %v522 = vpop.f32.mrf.mxu0
  %v523 = vadd.f32 %v86, %v522
  %524 = vdwg.mxu0
  %v525 = vmax.f32 %v334, 0.0
  %v526 = vmax.f32 %v336, 0.0
  %v527 = vmax.f32 %v447, 0.0
  %v528 = vmax.f32 %v449, 0.0
  %v529 = vmax.f32 %v338, 0.0
  %v530 = vmax.f32 %v340, 0.0
  %v531 = vmax.f32 %v451, 0.0
  %v532 = vmax.f32 %v453, 0.0
  %v533 = vmax.f32 %v344, 0.0
  %v534 = vmax.f32 %v346, 0.0
  %v535 = vmax.f32 %v457, 0.0
  %v536 = vmax.f32 %v459, 0.0
  %v537 = vmax.f32 %v348, 0.0
  %v538 = vmax.f32 %v350, 0.0
  %v539 = vmax.f32 %v461, 0.0
  %v540 = vmax.f32 %v463, 0.0
  %v541 = vmax.f32 %v354, 0.0
  %v542 = vmax.f32 %v356, 0.0
  %v543 = vmax.f32 %v467, 0.0
  %v544 = vmax.f32 %v469, 0.0
  %v545 = vmax.f32 %v358, 0.0
  %v546 = vmax.f32 %v360, 0.0
  %v547 = vmax.f32 %v471, 0.0
  %v548 = vmax.f32 %v473, 0.0
  %v549 = vmax.f32 %v364, 0.0
  %v550 = vmax.f32 %v366, 0.0
  %v551 = vmax.f32 %v477, 0.0
  %v552 = vmax.f32 %v479, 0.0
  %v553 = vmax.f32 %v368, 0.0
  %v554 = vmax.f32 %v370, 0.0
  %v555 = vmax.f32 %v481, 0.0
  %v556 = vmax.f32 %v483, 0.0
  %v557 = vmax.f32 %v374, 0.0
  %v558 = vmax.f32 %v376, 0.0
  %v559 = vmax.f32 %v487, 0.0
  %v560 = vmax.f32 %v489, 0.0
  %v561 = vmax.f32 %v378, 0.0
  %v562 = vmax.f32 %v380, 0.0
  %v563 = vmax.f32 %v491, 0.0
  %v564 = vmax.f32 %v493, 0.0
  %v565 = vmax.f32 %v384, 0.0
  %v566 = vmax.f32 %v386, 0.0
  %v567 = vmax.f32 %v497, 0.0
  %v568 = vmax.f32 %v499, 0.0
  %v569 = vmax.f32 %v388, 0.0
  %v570 = vmax.f32 %v390, 0.0
  %v571 = vmax.f32 %v501, 0.0
  %v572 = vmax.f32 %v503, 0.0
  %v573 = vmax.f32 %v394, 0.0
  %v574 = vmax.f32 %v396, 0.0
  %v575 = vmax.f32 %v507, 0.0
  %v576 = vmax.f32 %v509, 0.0
  %v577 = vmax.f32 %v398, 0.0
  %v578 = vmax.f32 %v400, 0.0
  %v579 = vmax.f32 %v511, 0.0
  %v580 = vmax.f32 %v513, 0.0
  %v581 = vmax.f32 %v404, 0.0
  %v582 = vmax.f32 %v406, 0.0
  %v583 = vmax.f32 %v517, 0.0
  %v584 = vmax.f32 %v519, 0.0
  %v585 = vmax.f32 %v408, 0.0
  %v586 = vmax.f32 %v410, 0.0
  %v587 = vmax.f32 %v521, 0.0
  %v588 = vmax.f32 %v523, 0.0
  %v589 = vpack.c.bf16 %v529, %v525
  %v590 = vpack.c.bf16 %v530, %v526
  %v591 = vpack.c.bf16 %v531, %v527
  %v592 = vpack.c.bf16 %v532, %v528
  %v593 = vpack.c.bf16 %v537, %v533
  %v594 = vpack.c.bf16 %v538, %v534
  %v595 = vpack.c.bf16 %v539, %v535
  %v596 = vpack.c.bf16 %v540, %v536
  %v597 = vpack.c.bf16 %v545, %v541
  %v598 = vpack.c.bf16 %v546, %v542
  %v599 = vpack.c.bf16 %v547, %v543
  %v600 = vpack.c.bf16 %v548, %v544
  %v601 = vpack.c.bf16 %v553, %v549
  %v602 = vpack.c.bf16 %v554, %v550
  %v603 = vpack.c.bf16 %v555, %v551
  %v604 = vpack.c.bf16 %v556, %v552
  %v605 = vpack.c.bf16 %v561, %v557
  %v606 = vpack.c.bf16 %v562, %v558
  %v607 = vpack.c.bf16 %v563, %v559
  %v608 = vpack.c.bf16 %v564, %v560
  %v609 = vpack.c.bf16 %v569, %v565
  %v610 = vpack.c.bf16 %v570, %v566
  %v611 = vpack.c.bf16 %v571, %v567
  %v612 = vpack.c.bf16 %v572, %v568
  %v613 = vpack.c.bf16 %v577, %v573
  %v614 = vpack.c.bf16 %v578, %v574
  %v615 = vpack.c.bf16 %v579, %v575
  %v616 = vpack.c.bf16 %v580, %v576
  %v617 = vpack.c.bf16 %v585, %v581
  %v618 = vpack.c.bf16 %v586, %v582
  %v619 = vpack.c.bf16 %v587, %v583
  %v620 = vpack.c.bf16 %v588, %v584
  %v621 = vld [vmem:[%s3] sm:$0xf]
  %v622 = vld [vmem:[%s3 + $0x4] sm:$0xf]
  %v623 = vld [vmem:[%s3 + $0x8] sm:$0xf]
  %v624 = vld [vmem:[%s3 + $0xc] sm:$0xf]
  %v625 = vld [vmem:[%s3 + $0x10] sm:$0xf]
  %v626 = vld [vmem:[%s3 + $0x14] sm:$0xf]
  %v627 = vld [vmem:[%s3 + $0x18] sm:$0xf]
  %v628 = vld [vmem:[%s3 + $0x1c] sm:$0xf]
  %v629 = vld [vmem:[%s3 + $0x20] sm:$0xf]
  %v630 = vld [vmem:[%s3 + $0x24] sm:$0xf]
  %v631 = vld [vmem:[%s3 + $0x28] sm:$0xf]
  %v632 = vld [vmem:[%s3 + $0x2c] sm:$0xf]
  %v633 = vld [vmem:[%s3 + $0x30] sm:$0xf]
  %v634 = vld [vmem:[%s3 + $0x34] sm:$0xf]
  %v635 = vld [vmem:[%s3 + $0x38] sm:$0xf]
  %v636 = vld [vmem:[%s3 + $0x3c] sm:$0xf]
  %v637 = vld [vmem:[%s3 + $0x40] sm:$0xf]
  %v638 = vld [vmem:[%s3 + $0x44] sm:$0xf]
  %v639 = vld [vmem:[%s3 + $0x48] sm:$0xf]
  %v640 = vld [vmem:[%s3 + $0x4c] sm:$0xf]
  %v641 = vld [vmem:[%s3 + $0x50] sm:$0xf]
  %v642 = vld [vmem:[%s3 + $0x54] sm:$0xf]
  %v643 = vld [vmem:[%s3 + $0x58] sm:$0xf]
  %v644 = vld [vmem:[%s3 + $0x5c] sm:$0xf]
  %v645 = vld [vmem:[%s3 + $0x60] sm:$0xf]
  %v646 = vld [vmem:[%s3 + $0x64] sm:$0xf]
  %v647 = vld [vmem:[%s3 + $0x68] sm:$0xf]
  %v648 = vld [vmem:[%s3 + $0x6c] sm:$0xf]
  %v649 = vld [vmem:[%s3 + $0x70] sm:$0xf]
  %v650 = vld [vmem:[%s3 + $0x74] sm:$0xf]
  %v651 = vld [vmem:[%s3 + $0x78] sm:$0xf]
  %v652 = vld [vmem:[%s3 + $0x7c] sm:$0xf]
  %v653 = vld [vmem:[%s3 + $0x80] sm:$0xf]
  %v654 = vld [vmem:[%s3 + $0x84] sm:$0xf]
  %v655 = vld [vmem:[%s3 + $0x88] sm:$0xf]
  %v656 = vld [vmem:[%s3 + $0x8c] sm:$0xf]
  %v657 = vld [vmem:[%s3 + $0x90] sm:$0xf]
  %v658 = vld [vmem:[%s3 + $0x94] sm:$0xf]
  %v659 = vld [vmem:[%s3 + $0x98] sm:$0xf]
  %v660 = vld [vmem:[%s3 + $0x9c] sm:$0xf]
  %v661 = vld [vmem:[%s3 + $0xa0] sm:$0xf]
  %v662 = vld [vmem:[%s3 + $0xa4] sm:$0xf]
  %v663 = vld [vmem:[%s3 + $0xa8] sm:$0xf]
  %v664 = vld [vmem:[%s3 + $0xac] sm:$0xf]
  %v665 = vld [vmem:[%s3 + $0xb0] sm:$0xf]
  %v666 = vld [vmem:[%s3 + $0xb4] sm:$0xf]
  %v667 = vld [vmem:[%s3 + $0xb8] sm:$0xf]
  %v668 = vld [vmem:[%s3 + $0xbc] sm:$0xf]
  %v669 = vld [vmem:[%s3 + $0xc0] sm:$0xf]
  %v670 = vld [vmem:[%s3 + $0xc4] sm:$0xf]
  %v671 = vld [vmem:[%s3 + $0xc8] sm:$0xf]
  %v672 = vld [vmem:[%s3 + $0xcc] sm:$0xf]
  %v673 = vld [vmem:[%s3 + $0xd0] sm:$0xf]
  %v674 = vld [vmem:[%s3 + $0xd4] sm:$0xf]
  %v675 = vld [vmem:[%s3 + $0xd8] sm:$0xf]
  %v676 = vld [vmem:[%s3 + $0xdc] sm:$0xf]
  %v677 = vld [vmem:[%s3 + $0xe0] sm:$0xf]
  %v678 = vld [vmem:[%s3 + $0xe4] sm:$0xf]
  %v679 = vld [vmem:[%s3 + $0xe8] sm:$0xf]
  %v680 = vld [vmem:[%s3 + $0xec] sm:$0xf]
  %v681 = vld [vmem:[%s3 + $0xf0] sm:$0xf]
  %v682 = vld [vmem:[%s3 + $0xf4] sm:$0xf]
  %v683 = vld [vmem:[%s3 + $0xf8] sm:$0xf]
  %v684 = vld [vmem:[%s3 + $0xfc] sm:$0xf]
  %v685 = vld [vmem:[%s4] sm:$0x1]
  %v687 = vlaneseq
  %v688 = vshrl.u32 %v687, 7
  %v689 = vsub.s32 0, %v688
  %v690 = vrot.slane %v685, %v689
  %v756 = vunpack.c.l.b16 %v621
  %v757 = vunpack.c.l.b16 %v622
  %v758 = vunpack.c.l.b16 %v623
  %v759 = vunpack.c.l.b16 %v624
  %v760 = vunpack.c.l.b16 %v625
  %v761 = vunpack.c.l.b16 %v626
  %v762 = vunpack.c.l.b16 %v627
  %v763 = vunpack.c.l.b16 %v628
  %v764 = vunpack.c.l.b16 %v629
  %v765 = vunpack.c.l.b16 %v630
  %v766 = vunpack.c.l.b16 %v631
  %v767 = vunpack.c.l.b16 %v632
  %v768 = vunpack.c.l.b16 %v633
  %v769 = vunpack.c.l.b16 %v634
  %v770 = vunpack.c.l.b16 %v635
  %v771 = vunpack.c.l.b16 %v636
  %v772 = vunpack.c.l.b16 %v637
  %v773 = vunpack.c.l.b16 %v638
  %v774 = vunpack.c.l.b16 %v639
  %v775 = vunpack.c.l.b16 %v640
  %v776 = vunpack.c.l.b16 %v641
  %v777 = vunpack.c.l.b16 %v642
  %v778 = vunpack.c.l.b16 %v643
  %v779 = vunpack.c.l.b16 %v644
  %v780 = vunpack.c.l.b16 %v645
  %v781 = vunpack.c.l.b16 %v646
  %v782 = vunpack.c.l.b16 %v647
  %v783 = vunpack.c.l.b16 %v648
  %v784 = vunpack.c.l.b16 %v649
  %v785 = vunpack.c.l.b16 %v650
  %v786 = vunpack.c.l.b16 %v651
  %v787 = vunpack.c.l.b16 %v652
  %v788 = vunpack.c.l.b16 %v653
  %v789 = vunpack.c.l.b16 %v654
  %v790 = vunpack.c.l.b16 %v655
  %v791 = vunpack.c.l.b16 %v656
  %v792 = vunpack.c.l.b16 %v657
  %v793 = vunpack.c.l.b16 %v658
  %v794 = vunpack.c.l.b16 %v659
  %v795 = vunpack.c.l.b16 %v660
  %v796 = vunpack.c.l.b16 %v661
  %v797 = vunpack.c.l.b16 %v662
  %v798 = vunpack.c.l.b16 %v663
  %v799 = vunpack.c.l.b16 %v664
  %v800 = vunpack.c.l.b16 %v665
  %v801 = vunpack.c.l.b16 %v666
  %v802 = vunpack.c.l.b16 %v667
  %v803 = vunpack.c.l.b16 %v668
  %v804 = vunpack.c.l.b16 %v669
  %v805 = vunpack.c.l.b16 %v670
  %v806 = vunpack.c.l.b16 %v671
  %v807 = vunpack.c.l.b16 %v672
  %v808 = vunpack.c.l.b16 %v673
  %v809 = vunpack.c.l.b16 %v674
  %v810 = vunpack.c.l.b16 %v675
  %v811 = vunpack.c.l.b16 %v676
  %v812 = vunpack.c.l.b16 %v677
  %v813 = vunpack.c.l.b16 %v678
  %v814 = vunpack.c.l.b16 %v679
  %v815 = vunpack.c.l.b16 %v680
  %v816 = vunpack.c.l.b16 %v681
  %v817 = vunpack.c.l.b16 %v682
  %v818 = vunpack.c.l.b16 %v683
  %v819 = vunpack.c.l.b16 %v684
  %v820 = vpack.c.b16 %v757, %v756
  %v821 = vpack.c.b16 %v759, %v758
  %v822 = vpack.c.b16 %v761, %v760
  %v823 = vpack.c.b16 %v763, %v762
  %v824 = vpack.c.b16 %v765, %v764
  %v825 = vpack.c.b16 %v767, %v766
  %v826 = vpack.c.b16 %v769, %v768
  %v827 = vpack.c.b16 %v771, %v770
  %v828 = vpack.c.b16 %v773, %v772
  %v829 = vpack.c.b16 %v775, %v774
  %v830 = vpack.c.b16 %v777, %v776
  %v831 = vpack.c.b16 %v779, %v778
  %v832 = vpack.c.b16 %v781, %v780
  %v833 = vpack.c.b16 %v783, %v782
  %v834 = vpack.c.b16 %v785, %v784
  %v835 = vpack.c.b16 %v787, %v786
  %v836 = vpack.c.b16 %v789, %v788
  %v837 = vpack.c.b16 %v791, %v790
  %v838 = vpack.c.b16 %v793, %v792
  %v839 = vpack.c.b16 %v795, %v794
  %v840 = vpack.c.b16 %v797, %v796
  %v841 = vpack.c.b16 %v799, %v798
  %v842 = vpack.c.b16 %v801, %v800
  %v843 = vpack.c.b16 %v803, %v802
  %v844 = vpack.c.b16 %v805, %v804
  %v845 = vpack.c.b16 %v807, %v806
  %v846 = vpack.c.b16 %v809, %v808
  %v847 = vpack.c.b16 %v811, %v810
  %v848 = vpack.c.b16 %v813, %v812
  %v849 = vpack.c.b16 %v815, %v814
  %v850 = vpack.c.b16 %v817, %v816
  %v851 = vpack.c.b16 %v819, %v818
  %884 = vmatprep.subr.bf16.mxu0 0
  %885 = vmatpush1.bf16.msra.mxu0 %v827
  %886 = vmatprep.subr.bf16.mxu0 0
  %887 = vmatpush1.bf16.msra.mxu0 %v826
  %888 = vmatprep.subr.bf16.mxu0 0
  %889 = vmatpush1.bf16.msra.mxu0 %v825
  %890 = vmatprep.subr.bf16.mxu0 0
  %891 = vmatpush1.bf16.msra.mxu0 %v824
  %892 = vmatprep.subr.bf16.mxu0 0
  %893 = vmatpush1.bf16.msra.mxu0 %v823
  %894 = vmatprep.subr.bf16.mxu0 0
  %895 = vmatpush1.bf16.msra.mxu0 %v822
  %896 = vmatprep.subr.bf16.mxu0 0
  %897 = vmatpush1.bf16.msra.mxu0 %v821
  %898 = vmatprep.subr.bf16.mxu0 0
  %899 = vmatpush1.bf16.msra.mxu0 %v820
  %900 = vmatprep.subr.bf16.mxu0 0
  %901 = vmatpush2.bf16.msra.mxu0 %v835
  %902 = vmatprep.subr.bf16.mxu0 0
  %903 = vmatpush2.bf16.msra.mxu0 %v834
  %904 = vmatprep.subr.bf16.mxu0 0
  %905 = vmatpush2.bf16.msra.mxu0 %v833
  %906 = vmatprep.subr.bf16.mxu0 0
  %907 = vmatpush2.bf16.msra.mxu0 %v832
  %908 = vmatprep.subr.bf16.mxu0 0
  %909 = vmatpush2.bf16.msra.mxu0 %v831
  %910 = vmatprep.subr.bf16.mxu0 0
  %911 = vmatpush2.bf16.msra.mxu0 %v830
  %912 = vmatprep.subr.bf16.mxu0 0
  %913 = vmatpush2.bf16.msra.mxu0 %v829
  %914 = vmatprep.subr.bf16.mxu0 0
  %915 = vmatpush2.bf16.msra.mxu0 %v828
  %916 = vmatprep.mubr.bf16.mxu0 %v590
  %917 = vmatmul.mubr.bf16.gmra.mxu0 %v589
  %v918 = vpop.f32.mrf.mxu0
  %v919 = vadd.f32 %v690, %v918
  %v920 = vpop.f32.mrf.mxu0
  %v921 = vpop.f32.mrf.mxu0
  %v922 = vadd.f32 %v690, %v921
  %v923 = vpop.f32.mrf.mxu0
  %924 = vmatprep.mubr.bf16.mxu0 %v594
  %925 = vmatmul.mubr.bf16.gmra.mxu0 %v593
  %v926 = vpop.f32.mrf.mxu0
  %v927 = vadd.f32 %v690, %v926
  %v928 = vpop.f32.mrf.mxu0
  %v929 = vpop.f32.mrf.mxu0
  %v930 = vadd.f32 %v690, %v929
  %v931 = vpop.f32.mrf.mxu0
  %932 = vmatprep.mubr.bf16.mxu0 %v598
  %933 = vmatmul.mubr.bf16.gmra.mxu0 %v597
  %v934 = vpop.f32.mrf.mxu0
  %v935 = vadd.f32 %v690, %v934
  %v936 = vpop.f32.mrf.mxu0
  %v937 = vpop.f32.mrf.mxu0
  %v938 = vadd.f32 %v690, %v937
  %v939 = vpop.f32.mrf.mxu0
  %940 = vmatprep.mubr.bf16.mxu0 %v602
  %941 = vmatmul.mubr.bf16.gmra.mxu0 %v601
  %v942 = vpop.f32.mrf.mxu0
  %v943 = vadd.f32 %v690, %v942
  %v944 = vpop.f32.mrf.mxu0
  %v945 = vpop.f32.mrf.mxu0
  %v946 = vadd.f32 %v690, %v945
  %v947 = vpop.f32.mrf.mxu0
  %948 = vmatprep.mubr.bf16.mxu0 %v606
  %949 = vmatmul.mubr.bf16.gmra.mxu0 %v605
  %v950 = vpop.f32.mrf.mxu0
  %v951 = vadd.f32 %v690, %v950
  %v952 = vpop.f32.mrf.mxu0
  %v953 = vpop.f32.mrf.mxu0
  %v954 = vadd.f32 %v690, %v953
  %v955 = vpop.f32.mrf.mxu0
  %956 = vmatprep.mubr.bf16.mxu0 %v610
  %957 = vmatmul.mubr.bf16.gmra.mxu0 %v609
  %v958 = vpop.f32.mrf.mxu0
  %v959 = vadd.f32 %v690, %v958
  %v960 = vpop.f32.mrf.mxu0
  %v961 = vpop.f32.mrf.mxu0
  %v962 = vadd.f32 %v690, %v961
  %v963 = vpop.f32.mrf.mxu0
  %964 = vmatprep.mubr.bf16.mxu0 %v614
  %965 = vmatmul.mubr.bf16.gmra.mxu0 %v613
  %v966 = vpop.f32.mrf.mxu0
  %v967 = vadd.f32 %v690, %v966
  %v968 = vpop.f32.mrf.mxu0
  %v969 = vpop.f32.mrf.mxu0
  %v970 = vadd.f32 %v690, %v969
  %v971 = vpop.f32.mrf.mxu0
  %972 = vmatprep.mubr.bf16.mxu0 %v618
  %973 = vmatmul.mubr.bf16.gmra.mxu0 %v617
  %v974 = vpop.f32.mrf.mxu0
  %v975 = vadd.f32 %v690, %v974
  %v976 = vpop.f32.mrf.mxu0
  %v977 = vpop.f32.mrf.mxu0
  %v978 = vadd.f32 %v690, %v977
  %v979 = vpop.f32.mrf.mxu0
  %980 = vdwg.mxu0
  %981 = vmatprep.subr.bf16.mxu0 0
  %982 = vmatpush1.bf16.msra.mxu0 %v843
  %983 = vmatprep.subr.bf16.mxu0 0
  %984 = vmatpush1.bf16.msra.mxu0 %v842
  %985 = vmatprep.subr.bf16.mxu0 0
  %986 = vmatpush1.bf16.msra.mxu0 %v841
  %987 = vmatprep.subr.bf16.mxu0 0
  %988 = vmatpush1.bf16.msra.mxu0 %v840
  %989 = vmatprep.subr.bf16.mxu0 0
  %990 = vmatpush1.bf16.msra.mxu0 %v839
  %991 = vmatprep.subr.bf16.mxu0 0
  %992 = vmatpush1.bf16.msra.mxu0 %v838
  %993 = vmatprep.subr.bf16.mxu0 0
  %994 = vmatpush1.bf16.msra.mxu0 %v837
  %995 = vmatprep.subr.bf16.mxu0 0
  %996 = vmatpush1.bf16.msra.mxu0 %v836
  %997 = vmatprep.subr.bf16.mxu0 0
  %998 = vmatpush2.bf16.msra.mxu0 %v851
  %999 = vmatprep.subr.bf16.mxu0 0
  %1000 = vmatpush2.bf16.msra.mxu0 %v850
  %1001 = vmatprep.subr.bf16.mxu0 0
  %1002 = vmatpush2.bf16.msra.mxu0 %v849
  %1003 = vmatprep.subr.bf16.mxu0 0
  %1004 = vmatpush2.bf16.msra.mxu0 %v848
  %1005 = vmatprep.subr.bf16.mxu0 0
  %1006 = vmatpush2.bf16.msra.mxu0 %v847
  %1007 = vmatprep.subr.bf16.mxu0 0
  %1008 = vmatpush2.bf16.msra.mxu0 %v846
  %1009 = vmatprep.subr.bf16.mxu0 0
  %1010 = vmatpush2.bf16.msra.mxu0 %v845
  %1011 = vmatprep.subr.bf16.mxu0 0
  %1012 = vmatpush2.bf16.msra.mxu0 %v844
  %1013 = vmatprep.mubr.bf16.mxu0 %v592
  %1014 = vmatmul.mubr.bf16.gmra.mxu0 %v591
  %v1015 = vpop.f32.mrf.mxu0
  %v1016 = vadd.f32 %v919, %v1015
  %v1017 = vpop.f32.mrf.mxu0
  %v1018 = vpop.f32.mrf.mxu0
  %v1019 = vadd.f32 %v922, %v1018
  %v1020 = vpop.f32.mrf.mxu0
  %1021 = vmatprep.mubr.bf16.mxu0 %v596
  %1022 = vmatmul.mubr.bf16.gmra.mxu0 %v595
  %v1023 = vpop.f32.mrf.mxu0
  %v1024 = vadd.f32 %v927, %v1023
  %v1025 = vpop.f32.mrf.mxu0
  %v1026 = vpop.f32.mrf.mxu0
  %v1027 = vadd.f32 %v930, %v1026
  %v1028 = vpop.f32.mrf.mxu0
  %1029 = vmatprep.mubr.bf16.mxu0 %v600
  %1030 = vmatmul.mubr.bf16.gmra.mxu0 %v599
  %v1031 = vpop.f32.mrf.mxu0
  %v1032 = vadd.f32 %v935, %v1031
  %v1033 = vpop.f32.mrf.mxu0
  %v1034 = vpop.f32.mrf.mxu0
  %v1035 = vadd.f32 %v938, %v1034
  %v1036 = vpop.f32.mrf.mxu0
  %1037 = vmatprep.mubr.bf16.mxu0 %v604
  %1038 = vmatmul.mubr.bf16.gmra.mxu0 %v603
  %v1039 = vpop.f32.mrf.mxu0
  %v1040 = vadd.f32 %v943, %v1039
  %v1041 = vpop.f32.mrf.mxu0
  %v1042 = vpop.f32.mrf.mxu0
  %v1043 = vadd.f32 %v946, %v1042
  %v1044 = vpop.f32.mrf.mxu0
  %1045 = vmatprep.mubr.bf16.mxu0 %v608
  %1046 = vmatmul.mubr.bf16.gmra.mxu0 %v607
  %v1047 = vpop.f32.mrf.mxu0
  %v1048 = vadd.f32 %v951, %v1047
  %v1049 = vpop.f32.mrf.mxu0
  %v1050 = vpop.f32.mrf.mxu0
  %v1051 = vadd.f32 %v954, %v1050
  %v1052 = vpop.f32.mrf.mxu0
  %1053 = vmatprep.mubr.bf16.mxu0 %v612
  %1054 = vmatmul.mubr.bf16.gmra.mxu0 %v611
  %v1055 = vpop.f32.mrf.mxu0
  %v1056 = vadd.f32 %v959, %v1055
  %v1057 = vpop.f32.mrf.mxu0
  %v1058 = vpop.f32.mrf.mxu0
  %v1059 = vadd.f32 %v962, %v1058
  %v1060 = vpop.f32.mrf.mxu0
  %1061 = vmatprep.mubr.bf16.mxu0 %v616
  %1062 = vmatmul.mubr.bf16.gmra.mxu0 %v615
  %v1063 = vpop.f32.mrf.mxu0
  %v1064 = vadd.f32 %v967, %v1063
  %v1065 = vpop.f32.mrf.mxu0
  %v1066 = vpop.f32.mrf.mxu0
  %v1067 = vadd.f32 %v970, %v1066
  %v1068 = vpop.f32.mrf.mxu0
  %1069 = vmatprep.mubr.bf16.mxu0 %v620
  %1070 = vmatmul.mubr.bf16.gmra.mxu0 %v619
  %v1071 = vpop.f32.mrf.mxu0
  %v1072 = vadd.f32 %v975, %v1071
  %v1073 = vpop.f32.mrf.mxu0
  %v1074 = vpop.f32.mrf.mxu0
  %v1075 = vadd.f32 %v978, %v1074
  %v1076 = vpop.f32.mrf.mxu0
  %1077 = vdwg.mxu0
  %v1078 = vmax.f32 %v1016, 0.0
  %v1079 = vmax.f32 %v1019, 0.0
  %v1080 = vmax.f32 %v1024, 0.0
  %v1081 = vmax.f32 %v1027, 0.0
  %v1082 = vmax.f32 %v1032, 0.0
  %v1083 = vmax.f32 %v1035, 0.0
  %v1084 = vmax.f32 %v1040, 0.0
  %v1085 = vmax.f32 %v1043, 0.0
  %v1086 = vmax.f32 %v1048, 0.0
  %v1087 = vmax.f32 %v1051, 0.0
  %v1088 = vmax.f32 %v1056, 0.0
  %v1089 = vmax.f32 %v1059, 0.0
  %v1090 = vmax.f32 %v1064, 0.0
  %v1091 = vmax.f32 %v1067, 0.0
  %v1092 = vmax.f32 %v1072, 0.0
  %v1093 = vmax.f32 %v1075, 0.0
  %1094 = vst [vmem:[%s5] sm:$0xff] %v1078
  %1095 = vst [vmem:[%s5 + $0x8] sm:$0xff] %v1079
  %1096 = vst [vmem:[%s5 + $0x10] sm:$0xff] %v1080
  %1097 = vst [vmem:[%s5 + $0x18] sm:$0xff] %v1081
  %1098 = vst [vmem:[%s5 + $0x20] sm:$0xff] %v1082
  %1099 = vst [vmem:[%s5 + $0x28] sm:$0xff] %v1083
  %1100 = vst [vmem:[%s5 + $0x30] sm:$0xff] %v1084
  %1101 = vst [vmem:[%s5 + $0x38] sm:$0xff] %v1085
  %1102 = vst [vmem:[%s5 + $0x40] sm:$0xff] %v1086
  %1103 = vst [vmem:[%s5 + $0x48] sm:$0xff] %v1087
  %1104 = vst [vmem:[%s5 + $0x50] sm:$0xff] %v1088
  %1105 = vst [vmem:[%s5 + $0x58] sm:$0xff] %v1089
  %1106 = vst [vmem:[%s5 + $0x60] sm:$0xff] %v1090
  %1107 = vst [vmem:[%s5 + $0x68] sm:$0xff] %v1091
  %1108 = vst [vmem:[%s5 + $0x70] sm:$0xff] %v1092
  %1109 = vst [vmem:[%s5 + $0x78] sm:$0xff] %v1093
  // Predicated region
  $region22: #{forward.1} parent=0 // pred_check
    _
  $region23: #{forward.1} parent=0 // pred_check_branch
    %1111 = sbr.rel (0) target = $region25
  $region24: #{forward.1} parent=0 // pred_region
    _
  $region25: #{forward.1} parent=0 // pred_fallthru
    _
  // Predicated region
  $region26: #{forward.1} parent=0 // pred_check
    _
  $region27: #{forward.1} parent=0 // pred_check_branch
    %1113 = sbr.rel (0) target = $region29
  $region28: #{forward.1} parent=0 // pred_region
    _
  $region29: #{forward.1} parent=0 // pred_fallthru
    _

</llo_original>
